<compile_context>
chip_gen: v7x
topology: tpu7x:2x2x1
jax: 0.10.0
libtpu: 0.0.40
codegen_flags: <defaults>
</compile_context>

<pallas_src>
import math

import jax
import jax.numpy as jnp
from jax.experimental import pallas as pl
from jax.experimental.pallas import tpu as pltpu

# Below this output size a plain jnp.broadcast_to is strictly better than a
# kernel launch (XLA fuses it into the consumer).
_BYPASS_BYTES = 1 << 20  # ~1 MiB

# Per-output-buffer tile budget.  Double-buffered (x2) this stays inside the
# default scoped-VMEM limit on every generation (v5e 16 MiB, v6e/v7x 32 MiB).
_TARGET_TILE_BYTES = 4 * 1024 * 1024


def _round_up(x: int, m: int) -> int:
    return (x + m - 1) // m * m


def _broadcast_row_kernel(emb_ref, out_ref):
    # emb_ref: (1, L) lane-dense embedding row (L % 128 == 0).
    # out_ref: (B_TILE, L) output tile.
    # Hot path: sublane broadcast of a single row to the whole batch tile,
    # stored with full-width (unmasked) lane stores.
    out_ref[...] = jnp.broadcast_to(emb_ref[...], out_ref.shape)


def search_task_embedding_forward(task_embedding: jax.Array,
                                  batch_size: int,
                                  *,
                                  force_pallas: bool = False) -> jax.Array:
    """Replicates the (1, D) task embedding to (batch_size, D)."""
    assert task_embedding.ndim == 2 and task_embedding.shape[0] == 1
    d = task_embedding.shape[1]
    dtype = task_embedding.dtype
    itemsize = jnp.dtype(dtype).itemsize

    # Tiny outputs: skip the kernel, let XLA fuse the broadcast.
    if not force_pallas and batch_size * d * itemsize <= _BYPASS_BYTES:
        return jnp.broadcast_to(task_embedding, (batch_size, d))

    # ---- lane-dense packing --------------------------------------------
    # Pack k logical output rows into one kernel row of width L = k * d with
    # L a multiple of 128, so stores are never lane-masked.
    k = 128 // math.gcd(d, 128)
    L = k * d
    rows_view = pl.cdiv(batch_size, k)      # kernel rows needed
    rows_out = _round_up(rows_view, 8)      # sublane-aligned output rows

    # ---- batch-tile sizing ----------------------------------------------
    b_tile = max(8, (_TARGET_TILE_BYTES // (L * itemsize)) // 8 * 8)
    b_tile = min(b_tile, rows_out)
    grid = (pl.cdiv(rows_out, b_tile),)

    # Replicate the row k times along lanes (wrapper-side, tiny) so the
    # kernel input is already lane-dense.
    emb_packed = jnp.tile(task_embedding, (1, k)) if k > 1 else task_embedding

    out_view = pl.pallas_call(
        _broadcast_row_kernel,
        out_shape=jax.ShapeDtypeStruct((rows_out, L), dtype),
        grid_spec=pltpu.PrefetchScalarGridSpec(
            num_scalar_prefetch=0,
            grid=grid,
            in_specs=[pl.BlockSpec((1, L), lambda i: (0, 0))],
            out_specs=pl.BlockSpec((b_tile, L), lambda i: (i, 0)),
        ),
        compiler_params=pltpu.CompilerParams(
            # Independent output tiles -> shard across v7x's 2 TensorCores;
            # neutral on single-core v5e/v6e.
            dimension_semantics=("parallel",)),
    )(emb_packed)

    # Layout plumbing back to (batch_size, d).  Rows are identical, so the
    # reshape is exact; the slice is a no-op when batch_size % (8*k) == 0.
    out = out_view.reshape(rows_out * k, d)
    if rows_out * k != batch_size:
        out = out[:batch_size]
    return out


if __name__ == "__main__":
    task_emb_dim = 32
    batch_size = 2

    # Deterministic parameter init (nn.Parameter(torch.zeros(1, D)) in the
    # module; use a PRNGKey(0) draw so the broadcast is non-trivially checked).
    key = jax.random.PRNGKey(0)
    task_embedding = jax.random.normal(key, (1, task_emb_dim), dtype=jnp.float32)

    ref = jnp.concatenate([task_embedding] * batch_size, axis=0)

    # 1) Pallas path, forced (small shapes normally bypass the kernel).
    out = search_task_embedding_forward(task_embedding, batch_size,
                                        force_pallas=True)
    out = jax.block_until_ready(out)
    assert out.shape == (batch_size, task_emb_dim), out.shape
    assert out.dtype == jnp.float32
    assert bool(jnp.array_equal(out, ref))

    # 2) Dispatch wrapper at the tiny shape (takes the broadcast bypass).
    out_small = jax.block_until_ready(
        search_task_embedding_forward(task_embedding, batch_size))
    assert bool(jnp.array_equal(out_small, ref))

    # 3) Slightly larger batch through the kernel: exercises multi-row packed
    #    tiles and the exact (no padding / no slice) path.
    bs2 = 64
    out2 = jax.block_until_ready(
        search_task_embedding_forward(task_embedding, bs2, force_pallas=True))
    ref2 = jnp.broadcast_to(task_embedding, (bs2, task_emb_dim))
    assert out2.shape == (bs2, task_emb_dim)
    assert bool(jnp.array_equal(out2, ref2))

    print("KERNEL_OK")
</pallas_src>

<mosaic_0001>
module attributes {stable_mosaic.version = 11 : i64} {
  func.func @_broadcast_row_kernel(%arg0: i32, %arg1: memref<1x128xf32, #tpu.memory_space<vmem>>, %arg2: memref<8x128xf32, #tpu.memory_space<vmem>>) attributes {dimension_semantics = [#tpu.dimension_semantics<parallel>], iteration_bounds = array<i64: 1>, scalar_prefetch = 0 : i64, scratch_operands = 0 : i64, tpu.core_type = #tpu.core_type<tc>, window_params = [{pipeline_mode = #tpu.pipeline_mode<synchronous>, transform_indices = @transform_0, window_bounds = array<i64: 1, 128>}, {transform_indices = @transform_1, window_bounds = array<i64: 8, 128>}]} {
    %c0 = arith.constant 0 : index
    %c0_0 = arith.constant 0 : index
    %0 = vector.load %arg1[%c0, %c0_0] : memref<1x128xf32, #tpu.memory_space<vmem>>, vector<1x128xf32>
    %1 = vector.shape_cast %0 : vector<1x128xf32> to vector<1x128xf32>
    %2 = vector.broadcast %1 : vector<1x128xf32> to vector<8x128xf32>
    %c0_1 = arith.constant 0 : index
    %c0_2 = arith.constant 0 : index
    %3 = vector.load %arg2[%c0_1, %c0_2] : memref<8x128xf32, #tpu.memory_space<vmem>>, vector<8x128xf32>
    tpu.vector_store %arg2[%c0_1, %c0_2], %2 {strides = array<i32>} : memref<8x128xf32, #tpu.memory_space<vmem>>, vector<8x128xf32>,
    return
  }
  func.func @transform_0(%arg0: i32) -> (i32, i32) {
    %c0_i32 = arith.constant 0 : i32
    %c0_i32_0 = arith.constant 0 : i32
    %c0_i32_1 = arith.constant 0 : i32
    return %c0_i32, %c0_i32_0 : i32, i32
  }
  func.func @transform_1(%arg0: i32) -> (i32, i32) {
    %c0_i32 = arith.constant 0 : i32
    %c0_i32_0 = arith.constant 0 : i32
    return %arg0, %c0_i32 : i32, i32
  }
}

</mosaic_0001>

<llo_original>
// kernel: tpu_custom_call.1
$region0: #{tpu_custom_call.1}
  #allocation0 [shape = 'u32[]', space=smem, size = 0x4, offset = 0x4, fixed_abs, tag = 'smem constant byte address 0x4 - core index']
  #allocation1 [shape = 'u32[144,128]{1,0:T(1,128)}', space=vmem, size = 0x12000, scoped, tag = 'internal scratch']
  %s0 = inlined_call_operand.hbm [shape: f32[1,128], index: 0, kind: input, shape index: {}]
  %s1 = inlined_call_operand.hbm [shape: f32[8,128], index: 1, kind: output, shape index: {}]
  %s2 = sld [smem:[#allocation0]]
  $region18: #{tpu_custom_call.1} parent=0
    _
  %s4 = ssub.s32 1, %s2
  %s5 = scalar_select 0, %s4, %s2
  $region1: #{tpu_custom_call.1} parent=0
    #allocation2 [shape = 'u8[512]{0}', space=vmem, size = 0x400, scoped, tag = 'input window, operand 0, single buffered']
    #allocation3 [shape = 's32[1]{0}', space=sflag, size = 0x4, scoped, tag = 'scoped memory for tpu_custom_call.1']
    #allocation4 [shape = 's32[1]{0}', space=sflag, size = 0x4, scoped, tag = 'scoped memory for tpu_custom_call.1']
    #allocation5 [shape = 'u8[4096]{0}', space=vmem, size = 0x1000, scoped, tag = 'output window, operand 0, single buffered']
    %6 = vsyncpa [#allocation3], 0
    %7 = vsyncpa [#allocation4], 0
    // Predicated region
    $region2: #{tpu_custom_call.1} parent=1 // pred_check
      _
    $region3: #{tpu_custom_call.1} parent=1 // pred_check_branch
      %9 = sbr.rel (0) target = $region5
    $region4: #{tpu_custom_call.1} parent=1 // pred_region
      %s11 = ssub.s32 16, 16
      %12 = vsyncadd [#allocation3], %s11
      %s14 = sshll.u32 [#allocation2], 4
      %s15 = int_to_ptr.vmem [resolvable:$true] %s14
      %17 = dma.hbm_to_vmem [thread:$0]  %s0, 16, %s15, [#allocation3]
    $region5: #{tpu_custom_call.1} parent=1 // pred_fallthru
      _
    // Predicated region
    $region6: #{tpu_custom_call.1} parent=1 // pred_check
      _
    $region7: #{tpu_custom_call.1} parent=1 // pred_check_branch
      %19 = sbr.rel (0) target = $region9
    $region8: #{tpu_custom_call.1} parent=1 // pred_region
      %20 = dma.done [#allocation3], 16
    $region9: #{tpu_custom_call.1} parent=1 // pred_fallthru
      _
    %v21 = vld [vmem:[#allocation2] sm:$0x1]
    %v23 = vlaneseq
    %v24 = vshrl.u32 %v23, 7
    %v25 = vsub.s32 0, %v24
    %v26 = vrot.slane %v21, %v25
    %28 = vst [vmem:[#allocation5] sm:$0xff] %v26
    // Predicated region
    $region10: #{tpu_custom_call.1} parent=1 // pred_check
      _
    $region11: #{tpu_custom_call.1} parent=1 // pred_check_branch
      %30 = sbr.rel (0) target = $region13
    $region12: #{tpu_custom_call.1} parent=1 // pred_region
      %s32 = ssub.s32 128, 128
      %33 = vsyncadd [#allocation4], %s32
      %s35 = sshll.u32 [#allocation5], 4
      %s36 = int_to_ptr.vmem [resolvable:$true] %s35
      %38 = dma.vmem_to_hbm [thread:$0]  %s36, 128, %s1, [#allocation4]
    $region13: #{tpu_custom_call.1} parent=1 // pred_fallthru
      _
    // Predicated region
    $region14: #{tpu_custom_call.1} parent=1 // pred_check
      _
    $region15: #{tpu_custom_call.1} parent=1 // pred_check_branch
      %40 = sbr.rel (0) target = $region17
    $region16: #{tpu_custom_call.1} parent=1 // pred_region
      %41 = dma.done [#allocation4], 128
    $region17: #{tpu_custom_call.1} parent=1 // pred_fallthru
      _
    %42 = vsyncpa [#allocation3], 1
    %43 = vsyncpa [#allocation4], 1

</llo_original>
